<compile_context>
chip_gen: v7x
topology: tpu7x:2x2x1
jax: 0.10.0
libtpu: 0.0.40
codegen_flags: <defaults>
</compile_context>

<pallas_src>
import numpy as np
import jax
import jax.numpy as jnp
from jax.experimental import pallas as pl
from jax.experimental.pallas import tpu as pltpu


# ---------------------------------------------------------------------------
# freqs buffer construction (mirrors RotaryEmbeddingND.__init__ / get_freqs)
# ---------------------------------------------------------------------------
def build_freqs(dims, sizes, theta=10000.0):
    n = len(dims)
    all_freqs = []
    for i, (dim, seq_len) in enumerate(zip(dims, sizes)):
        inv = 1.0 / theta ** (
            jnp.arange(0, dim, 2)[: dim // 2].astype(jnp.float32) / dim
        )
        pos = jnp.arange(seq_len, dtype=jnp.float32)
        f = pos[:, None] * inv[None, :]          # (seq_len, dim//2)
        f = jnp.repeat(f, 2, axis=-1)            # '... n -> ... (n r)', r=2
        shape = [1] * n + [dim]
        shape[i] = seq_len
        f = jnp.broadcast_to(f.reshape(shape), tuple(sizes) + (dim,))
        all_freqs.append(f)
    freqs = jnp.concatenate(all_freqs, axis=-1)  # sizes + (sum(dims),)
    return freqs.reshape(-1, sum(dims))          # flatten: '(...) d'


# ---------------------------------------------------------------------------
# Kernel body:
#   out = x * cos + roll(x, D-1) * sin_even + roll(x, 1) * sin_odd
# where roll(x, D-1)[j] = x[j+1] and roll(x, 1)[j] = x[j-1] (circular), and
#   sin_even[j] = -sin[j] on even lanes (else 0)
#   sin_odd[j]  = +sin[j] on odd  lanes (else 0)
# which equals x*cos(f) + rotate_half(x)*sin(f) with interleaved pairs
# (x0, x1) -> (-x1, x0).
# ---------------------------------------------------------------------------
def rope_kernel(cos_ref, sin_e_ref, sin_o_ref, x_ref, o_ref):
    x = x_ref[...].astype(jnp.float32)      # (TB, S, D)
    c = cos_ref[...]                        # (S, D)  -- broadcasts over TB
    se = sin_e_ref[...]                     # (S, D)
    so = sin_o_ref[...]                     # (S, D)
    d = x.shape[-1]
    x_next = pltpu.roll(x, shift=d - 1, axis=2)   # lane j <- x[j+1] (circular)
    x_prev = pltpu.roll(x, shift=1, axis=2)       # lane j <- x[j-1] (circular)
    out = x * c + x_next * se + x_prev * so
    o_ref[...] = out.astype(o_ref.dtype)


def _pick_tb(bh, row_bytes, table_bytes, budget_bytes):
    """Largest row-tile TB that divides bh, fits the VMEM budget, and leaves
    >=2 grid steps (so the v7x megacore can shard across both TensorCores)."""
    # ~2x double-buffered input block + 2x output block + f32 temporaries
    # => budget roughly 8x the f32 row footprint per resident row.
    max_tb = max(1, (budget_bytes - table_bytes) // (8 * row_bytes))
    tb = min(max_tb, bh)
    if bh >= 2:
        tb = min(tb, max(1, bh // 2))
    while bh % tb:
        tb -= 1
    return tb


def rotary_embedding_nd(x, freqs, *, vmem_budget_bytes=24 << 20):
    """x: (..., S, D) with flatten=True semantics; freqs: (max_seq, D)."""
    *lead, S, D = x.shape
    assert D % 2 == 0, "head dim must be even for RoPE"
    assert S <= freqs.shape[0], "sequence length exceeds precomputed freqs"
    f = freqs[:S].astype(jnp.float32)

    # Precompute tables once (grid-invariant): cos, and sin with the
    # rotate_half sign / even-odd mask folded in.
    cos = jnp.cos(f)
    sin = jnp.sin(f)
    lane_odd = (jnp.arange(D) % 2).astype(bool)
    sin_e = jnp.where(lane_odd, 0.0, -sin)   # even lanes: -sin (uses x[j+1])
    sin_o = jnp.where(lane_odd, sin, 0.0)    # odd  lanes: +sin (uses x[j-1])

    BH = int(np.prod(lead)) if lead else 1
    x2 = x.reshape(BH, S, D)

    row_bytes = S * D * 4                    # f32 working set per (S, D) row
    table_bytes = 3 * S * D * 4
    TB = _pick_tb(BH, row_bytes, table_bytes, vmem_budget_bytes)
    grid = (BH // TB,)

    out = pl.pallas_call(
        rope_kernel,
        out_shape=jax.ShapeDtypeStruct((BH, S, D), x.dtype),
        grid_spec=pltpu.PrefetchScalarGridSpec(
            num_scalar_prefetch=0,
            grid=grid,
            in_specs=[
                pl.BlockSpec((S, D), lambda b: (0, 0)),        # cos   (invariant)
                pl.BlockSpec((S, D), lambda b: (0, 0)),        # sin_e (invariant)
                pl.BlockSpec((S, D), lambda b: (0, 0)),        # sin_o (invariant)
                pl.BlockSpec((TB, S, D), lambda b: (b, 0, 0)),  # x rows
            ],
            out_specs=pl.BlockSpec((TB, S, D), lambda b: (b, 0, 0)),
        ),
        compiler_params=pltpu.CompilerParams(
            dimension_semantics=("parallel",),
            vmem_limit_bytes=48 << 20,   # headroom, still well under v7x 64 MiB
        ),
    )(cos, sin_e, sin_o, x2)
    return out.reshape(x.shape)


# ---------------------------------------------------------------------------
# Pure JAX reference (for correctness check)
# ---------------------------------------------------------------------------
def _rotate_half_ref(x):
    shp = x.shape
    xr = x.reshape(shp[:-1] + (shp[-1] // 2, 2))
    x1 = xr[..., 0]
    x2 = xr[..., 1]
    return jnp.stack((-x2, x1), axis=-1).reshape(shp)


def _ref_forward(x, freqs):
    S = x.shape[-2]
    f = freqs[:S]
    return x * jnp.cos(f) + _rotate_half_ref(x) * jnp.sin(f)


if __name__ == "__main__":
    # Axial RoPE over 3 axes: dims per axis sum to head_dim D=128,
    # sizes multiply to flattened sequence length S=64.
    dims = (32, 32, 64)
    sizes = (4, 4, 4)
    theta = 10000.0

    freqs = build_freqs(dims, sizes, theta)      # (64, 128)

    key = jax.random.PRNGKey(0)
    B, H = 2, 4
    S, D = int(np.prod(sizes)), int(sum(dims))
    x = jax.random.normal(key, (B, H, S, D), dtype=jnp.float32)

    out = rotary_embedding_nd(x, freqs)
    out = jax.block_until_ready(out)

    ref = _ref_forward(x, freqs)
    assert out.shape == x.shape and out.dtype == x.dtype
    np.testing.assert_allclose(np.asarray(out), np.asarray(ref),
                               rtol=1e-5, atol=1e-5)
    print("KERNEL_OK")
</pallas_src>

<mosaic_0001>
module attributes {stable_mosaic.version = 11 : i64} {
  func.func @rope_kernel(%arg0: i32, %arg1: memref<64x128xf32, #tpu.memory_space<vmem>>, %arg2: memref<64x128xf32, #tpu.memory_space<vmem>>, %arg3: memref<64x128xf32, #tpu.memory_space<vmem>>, %arg4: memref<4x64x128xf32, #tpu.memory_space<vmem>>, %arg5: memref<4x64x128xf32, #tpu.memory_space<vmem>>) attributes {dimension_semantics = [#tpu.dimension_semantics<parallel>], iteration_bounds = array<i64: 2>, scalar_prefetch = 0 : i64, scratch_operands = 0 : i64, tpu.core_type = #tpu.core_type<tc>, window_params = [{pipeline_mode = #tpu.pipeline_mode<synchronous>, transform_indices = @transform_0, window_bounds = array<i64: 64, 128>}, {pipeline_mode = #tpu.pipeline_mode<synchronous>, transform_indices = @transform_1, window_bounds = array<i64: 64, 128>}, {pipeline_mode = #tpu.pipeline_mode<synchronous>, transform_indices = @transform_2, window_bounds = array<i64: 64, 128>}, {transform_indices = @transform_3, window_bounds = array<i64: 4, 64, 128>}, {transform_indices = @transform_4, window_bounds = array<i64: 4, 64, 128>}]} {
    %c0 = arith.constant 0 : index
    %c0_0 = arith.constant 0 : index
    %c0_1 = arith.constant 0 : index
    %0 = vector.load %arg4[%c0, %c0_0, %c0_1] : memref<4x64x128xf32, #tpu.memory_space<vmem>>, vector<4x64x128xf32>
    %c0_2 = arith.constant 0 : index
    %c0_3 = arith.constant 0 : index
    %1 = vector.load %arg1[%c0_2, %c0_3] : memref<64x128xf32, #tpu.memory_space<vmem>>, vector<64x128xf32>
    %c0_4 = arith.constant 0 : index
    %c0_5 = arith.constant 0 : index
    %2 = vector.load %arg2[%c0_4, %c0_5] : memref<64x128xf32, #tpu.memory_space<vmem>>, vector<64x128xf32>
    %c0_6 = arith.constant 0 : index
    %c0_7 = arith.constant 0 : index
    %3 = vector.load %arg3[%c0_6, %c0_7] : memref<64x128xf32, #tpu.memory_space<vmem>>, vector<64x128xf32>
    %c127_i32 = arith.constant 127 : i32
    %4 = tpu.dynamic_rotate %0 by %c127_i32 dim 2 : vector<4x64x128xf32>, i32 -> vector<4x64x128xf32>
    %c1_i32 = arith.constant 1 : i32
    %5 = tpu.dynamic_rotate %0 by %c1_i32 dim 2 : vector<4x64x128xf32>, i32 -> vector<4x64x128xf32>
    %6 = vector.shape_cast %1 : vector<64x128xf32> to vector<1x64x128xf32>
    %7 = vector.broadcast %6 : vector<1x64x128xf32> to vector<4x64x128xf32>
    %8 = arith.mulf %0, %7 : vector<4x64x128xf32>
    %9 = vector.shape_cast %2 : vector<64x128xf32> to vector<1x64x128xf32>
    %10 = vector.broadcast %9 : vector<1x64x128xf32> to vector<4x64x128xf32>
    %11 = arith.mulf %4, %10 : vector<4x64x128xf32>
    %12 = arith.addf %8, %11 : vector<4x64x128xf32>
    %13 = vector.shape_cast %3 : vector<64x128xf32> to vector<1x64x128xf32>
    %14 = vector.broadcast %13 : vector<1x64x128xf32> to vector<4x64x128xf32>
    %15 = arith.mulf %5, %14 : vector<4x64x128xf32>
    %16 = arith.addf %12, %15 : vector<4x64x128xf32>
    %c0_8 = arith.constant 0 : index
    %c0_9 = arith.constant 0 : index
    %c0_10 = arith.constant 0 : index
    %17 = vector.load %arg5[%c0_8, %c0_9, %c0_10] : memref<4x64x128xf32, #tpu.memory_space<vmem>>, vector<4x64x128xf32>
    tpu.vector_store %arg5[%c0_8, %c0_9, %c0_10], %16 {strides = array<i32>} : memref<4x64x128xf32, #tpu.memory_space<vmem>>, vector<4x64x128xf32>,
    return
  }
  func.func @transform_0(%arg0: i32) -> (i32, i32) {
    %c0_i32 = arith.constant 0 : i32
    %c0_i32_0 = arith.constant 0 : i32
    %c0_i32_1 = arith.constant 0 : i32
    return %c0_i32, %c0_i32_0 : i32, i32
  }
  func.func @transform_1(%arg0: i32) -> (i32, i32) {
    %c0_i32 = arith.constant 0 : i32
    %c0_i32_0 = arith.constant 0 : i32
    %c0_i32_1 = arith.constant 0 : i32
    return %c0_i32, %c0_i32_0 : i32, i32
  }
  func.func @transform_2(%arg0: i32) -> (i32, i32) {
    %c0_i32 = arith.constant 0 : i32
    %c0_i32_0 = arith.constant 0 : i32
    %c0_i32_1 = arith.constant 0 : i32
    return %c0_i32, %c0_i32_0 : i32, i32
  }
  func.func @transform_3(%arg0: i32) -> (i32, i32, i32) {
    %c0_i32 = arith.constant 0 : i32
    %c0_i32_0 = arith.constant 0 : i32
    %c0_i32_1 = arith.constant 0 : i32
    return %arg0, %c0_i32, %c0_i32_0 : i32, i32, i32
  }
  func.func @transform_4(%arg0: i32) -> (i32, i32, i32) {
    %c0_i32 = arith.constant 0 : i32
    %c0_i32_0 = arith.constant 0 : i32
    %c0_i32_1 = arith.constant 0 : i32
    return %arg0, %c0_i32, %c0_i32_0 : i32, i32, i32
  }
}

</mosaic_0001>

<llo_original>
// kernel: tpu_custom_call.1
$region0: #{tpu_custom_call.1}
  #allocation0 [shape = 'u32[]', space=smem, size = 0x4, offset = 0x4, fixed_abs, tag = 'smem constant byte address 0x4 - core index']
  #allocation1 [shape = 'u32[144,128]{1,0:T(1,128)}', space=vmem, size = 0x12000, scoped, tag = 'internal scratch']
  %s0 = inlined_call_operand.hbm [shape: f32[64,128], index: 0, kind: input, shape index: {}]
  %s1 = inlined_call_operand.hbm [shape: f32[64,128], index: 1, kind: input, shape index: {}]
  %s2 = inlined_call_operand.hbm [shape: f32[64,128], index: 2, kind: input, shape index: {}]
  %s3 = inlined_call_operand.hbm [shape: f32[8,64,128], index: 3, kind: input, shape index: {}]
  %s4 = inlined_call_operand.hbm [shape: f32[8,64,128], index: 4, kind: output, shape index: {}]
  %s5 = sld [smem:[#allocation0]]
  $region65: #{tpu_custom_call.1} parent=0
    _
  %s7 = ssub.s32 1, %s5
  %s8 = scalar_select 0, %s7, %s5
  $region1: #{tpu_custom_call.1} parent=0
    #allocation2 [shape = 'u8[32768]{0}', space=vmem, size = 0x8000, scoped, tag = 'input window, operand 0, single buffered']
    #allocation3 [shape = 's32[2]{0}', space=sflag, size = 0x8, scoped, tag = 'scoped memory for tpu_custom_call.1']
    #allocation4 [shape = 's32[2]{0}', space=sflag, size = 0x8, scoped, tag = 'scoped memory for tpu_custom_call.1']
    #allocation5 [shape = 'u8[32768]{0}', space=vmem, size = 0x8000, scoped, tag = 'input window, operand 1, single buffered']
    #allocation6 [shape = 's32[1]{0}', space=sflag, size = 0x4, scoped, tag = 'scoped memory for tpu_custom_call.1']
    #allocation7 [shape = 'u8[32768]{0}', space=vmem, size = 0x8000, scoped, tag = 'input window, operand 2, single buffered']
    #allocation8 [shape = 'u8[262144]{0}', space=vmem, size = 0x40000, scoped, tag = 'input window, operand 3']
    #allocation9 [shape = 's32[2]{0}', space=sflag, size = 0x8, scoped, tag = 'scoped memory for tpu_custom_call.1']
    #allocation10 [shape = 'u8[262144]{0}', space=vmem, size = 0x40000, scoped, tag = 'output window, operand 0']
    %9 = vsyncpa [#allocation3], 0
    %10 = vsyncpa [#allocation6], 0
    %11 = vsyncpa [#allocation9], 0
    %s12 = scalar_lea.sflag [#allocation9], 1
    %13 = vsyncpa %s12, 0
    %14 = vsyncpa [#allocation4], 0
    %s15 = scalar_lea.sflag [#allocation4], 1
    %16 = vsyncpa %s15, 0
    loop: start=0, step=1, limit=4
    $region2: #{tpu_custom_call.1} parent=1 // loop_pre_header
      _
    $region3: #{tpu_custom_call.1} parent=1 // loop_header
      %s18 = sphi 0, %s22
      %p19 = scmp.ge.s32.totalorder %s18, 4
      %s26 = sphi 0, %s26
      %s28 = sphi 0, %s26
      %s29 = sphi 0, %s28
      %s43 = sphi 0, %s29
      %s47 = sphi 0, %s47
      %s49 = sphi 0, %s47
      %s50 = sphi 0, %s49
      %s64 = sphi 0, %s50
      %s68 = sphi 0, %s68
      %s70 = sphi 0, %s68
      %s71 = sphi 0, %s70
      %s85 = sphi 0, %s71
      %s91 = sphi 0, %s93
      %s94 = sphi 0, %s91
      %s95 = sphi 0, %s94
      %s111 = sphi 0, %s95
      %s117 = sphi 0, %s119
      %s120 = sphi 0, %s117
      %s121 = sphi 0, %s120
      %s137 = sphi 0, %s121
    $region4: #{tpu_custom_call.1} parent=1 // loop_header_branch
      %21 = sbr.rel (%p19) target = $region8
    $region5: #{tpu_custom_call.1} parent=1 // loop_body
      %s23 = ssub.s32 %s18, 1
      %s24 = ssub.s32 %s18, 2
      %s25 = sadd.s32 %s18, 1
      %s27 = sadd.s32 %s26, 1
      %p30 = scmp.eq.s32.totalorder %s18, 1
      %p31 = scmp.ne.s32.totalorder %s26, %s28
      %p32 = scmp.eq.s32.totalorder %s18, 0
      %p33 = por %p31, %p32
      %p34 = scmp.ne.s32.totalorder %s26, %s28
      %p35 = scmp.eq.s32.totalorder %s23, 1
      %p36 = por %p34, %p35
      %p37 = scmp.ne.s32.totalorder %s28, %s29
      %p38 = scmp.eq.s32.totalorder %s23, 0
      %p39 = por %p37, %p38
      %p40 = scmp.ne.s32.totalorder %s28, %s29
      %p41 = scmp.eq.s32.totalorder %s24, 1
      %p42 = por %p40, %p41
      %p44 = scmp.ne.s32.totalorder %s29, %s43
      %p45 = scmp.eq.s32.totalorder %s24, 0
      %p46 = por %p44, %p45
      %s48 = sadd.s32 %s47, 1
      %p51 = scmp.eq.s32.totalorder %s18, 1
      %p52 = scmp.ne.s32.totalorder %s47, %s49
      %p53 = scmp.eq.s32.totalorder %s18, 0
      %p54 = por %p52, %p53
      %p55 = scmp.ne.s32.totalorder %s47, %s49
      %p56 = scmp.eq.s32.totalorder %s23, 1
      %p57 = por %p55, %p56
      %p58 = scmp.ne.s32.totalorder %s49, %s50
      %p59 = scmp.eq.s32.totalorder %s23, 0
      %p60 = por %p58, %p59
      %p61 = scmp.ne.s32.totalorder %s49, %s50
      %p62 = scmp.eq.s32.totalorder %s24, 1
      %p63 = por %p61, %p62
      %p65 = scmp.ne.s32.totalorder %s50, %s64
      %p66 = scmp.eq.s32.totalorder %s24, 0
      %p67 = por %p65, %p66
      %s69 = sadd.s32 %s68, 1
      %p72 = scmp.eq.s32.totalorder %s18, 1
      %p73 = scmp.ne.s32.totalorder %s68, %s70
      %p74 = scmp.eq.s32.totalorder %s18, 0
      %p75 = por %p73, %p74
      %p76 = scmp.ne.s32.totalorder %s68, %s70
      %p77 = scmp.eq.s32.totalorder %s23, 1
      %p78 = por %p76, %p77
      %p79 = scmp.ne.s32.totalorder %s70, %s71
      %p80 = scmp.eq.s32.totalorder %s23, 0
      %p81 = por %p79, %p80
      %p82 = scmp.ne.s32.totalorder %s70, %s71
      %p83 = scmp.eq.s32.totalorder %s24, 1
      %p84 = por %p82, %p83
      %p86 = scmp.ne.s32.totalorder %s71, %s85
      %p87 = scmp.eq.s32.totalorder %s24, 0
      %p88 = por %p86, %p87
      %s89 = ssub.s32 %s18, %s25
      %p90 = scmp.eq.s32.totalorder %s89, 0
      %s92 = sadd.s32 %s91, 1
      %s93 = scalar_select %p90, %s91, %s92
      %p96 = pneg %p90
      %p97 = scmp.eq.s32.totalorder %s18, 1
      %p98 = por %p96, %p97
      %p99 = scmp.ne.s32.totalorder %s91, %s94
      %p100 = scmp.eq.s32.totalorder %s18, 0
      %p101 = por %p99, %p100
      %p102 = scmp.ne.s32.totalorder %s91, %s94
      %p103 = scmp.eq.s32.totalorder %s23, 1
      %p104 = por %p102, %p103
      %p105 = scmp.ne.s32.totalorder %s94, %s95
      %p106 = scmp.eq.s32.totalorder %s23, 0
      %p107 = por %p105, %p106
      %p108 = scmp.ne.s32.totalorder %s94, %s95
      %p109 = scmp.eq.s32.totalorder %s24, 1
      %p110 = por %p108, %p109
      %p112 = scmp.ne.s32.totalorder %s95, %s111
      %p113 = scmp.eq.s32.totalorder %s24, 0
      %p114 = por %p112, %p113
      %s115 = ssub.s32 %s18, %s25
      %p116 = scmp.eq.s32.totalorder %s115, 0
      %s118 = sadd.s32 %s117, 1
      %s119 = scalar_select %p116, %s117, %s118
      %p122 = pneg %p116
      %p123 = scmp.eq.s32.totalorder %s18, 1
      %p124 = por %p122, %p123
      %p125 = scmp.ne.s32.totalorder %s117, %s120
      %p126 = scmp.eq.s32.totalorder %s18, 0
      %p127 = por %p125, %p126
      %p128 = scmp.ne.s32.totalorder %s117, %s120
      %p129 = scmp.eq.s32.totalorder %s23, 1
      %p130 = por %p128, %p129
      %p131 = scmp.ne.s32.totalorder %s120, %s121
      %p132 = scmp.eq.s32.totalorder %s23, 0
      %p133 = por %p131, %p132
      %p134 = scmp.ne.s32.totalorder %s120, %s121
      %p135 = scmp.eq.s32.totalorder %s24, 1
      %p136 = por %p134, %p135
      %p138 = scmp.ne.s32.totalorder %s121, %s137
      %p139 = scmp.eq.s32.totalorder %s24, 0
      %p140 = por %p138, %p139
      %p141 = scmp.le.s32.totalorder 1, %s18
      %p142 = scmp.lt.s32.totalorder %s18, 3
      %p143 = pnand %p141, %p142
      %p144 = pneg %p143
      // Predicated region
      $region9: #{tpu_custom_call.1} parent=5 // pred_check
        _
      $region10: #{tpu_custom_call.1} parent=5 // pred_check_branch
        %146 = sbr.rel (%p143) target = $region12
      $region11: #{tpu_custom_call.1} parent=5 // pred_region
        %s147 = ssub.s32 %s18, 1
        // Predicated region
        $region13: #{tpu_custom_call.1} parent=11 // pred_check
          %p148 = pneg %p39
        $region14: #{tpu_custom_call.1} parent=11 // pred_check_branch
          %150 = sbr.rel (%p148) target = $region16
        $region15: #{tpu_custom_call.1} parent=11 // pred_region
          %s152 = ssub.s32 1024, 1024
          %153 = vsyncadd [#allocation3], %s152
          %s154 = sshll.u32 [#allocation2], 4
          %s155 = int_to_ptr.vmem [resolvable:$true] %s154
          %160 = dma.hbm_to_vmem [thread:$0]  %s0, 1024, %s155, [#allocation3], 128, 128, 8
        $region16: #{tpu_custom_call.1} parent=11 // pred_fallthru
          _
        // Predicated region
        $region17: #{tpu_custom_call.1} parent=11 // pred_check
          %p161 = pneg %p60
        $region18: #{tpu_custom_call.1} parent=11 // pred_check_branch
          %163 = sbr.rel (%p161) target = $region20
        $region19: #{tpu_custom_call.1} parent=11 // pred_region
          %s165 = ssub.s32 1024, 1024
          %166 = vsyncadd [#allocation6], %s165
          %s167 = sshll.u32 [#allocation5], 4
          %s168 = int_to_ptr.vmem [resolvable:$true] %s167
          %173 = dma.hbm_to_vmem [thread:$0]  %s1, 1024, %s168, [#allocation6], 128, 128, 8
        $region20: #{tpu_custom_call.1} parent=11 // pred_fallthru
          _
        // Predicated region
        $region21: #{tpu_custom_call.1} parent=11 // pred_check
          %p174 = pneg %p81
        $region22: #{tpu_custom_call.1} parent=11 // pred_check_branch
          %176 = sbr.rel (%p174) target = $region24
        $region23: #{tpu_custom_call.1} parent=11 // pred_region
          %s178 = ssub.s32 1024, 1024
          %179 = vsyncadd [#allocation6], %s178
          %s180 = sshll.u32 [#allocation7], 4
          %s181 = int_to_ptr.vmem [resolvable:$true] %s180
          %186 = dma.hbm_to_vmem [thread:$0]  %s2, 1024, %s181, [#allocation6], 128, 128, 8
        $region24: #{tpu_custom_call.1} parent=11 // pred_fallthru
          _
      $region12: #{tpu_custom_call.1} parent=5 // pred_fallthru
        _
      %p187 = scmp.lt.s32.totalorder %s18, 2
      // Predicated region
      $region25: #{tpu_custom_call.1} parent=5 // pred_check
        %p188 = pneg %p187
      $region26: #{tpu_custom_call.1} parent=5 // pred_check_branch
        %190 = sbr.rel (%p188) target = $region28
      $region27: #{tpu_custom_call.1} parent=5 // pred_region
        // Predicated region
        $region29: #{tpu_custom_call.1} parent=27 // pred_check
          %p191 = pneg %p101
        $region30: #{tpu_custom_call.1} parent=27 // pred_check_branch
          %193 = sbr.rel (%p191) target = $region32
        $region31: #{tpu_custom_call.1} parent=27 // pred_region
          %s194 = sand.u32 %s91, 1
          %s195 = scalar_lea.sflag [#allocation9], %s194
          %s196 = sand.u32 %s91, 1
          %s197 = smul.addr %s196, 256
          %s198 = scalar_lea.vmem [#allocation8], %s197
          %s199 = smul.u32 4, %s18
          %s201 = ssub.s32 4096, 4096
          %202 = vsyncadd %s195, %s201
          %s203 = smul.addr %s199, 8
          %s204 = smul.addr %s203, 128
          %s205 = scalar_lea.hbm %s3, %s204
          %s206 = sshll.u32 %s198, 4
          %s207 = int_to_ptr.vmem [resolvable:$true] %s206
          %212 = dma.hbm_to_vmem [thread:$0]  %s205, 4096, %s207, %s195, 128, 128, 8
        $region32: #{tpu_custom_call.1} parent=27 // pred_fallthru
          _
      $region28: #{tpu_custom_call.1} parent=5 // pred_fallthru
        _
      %p213 = scmp.le.s32.totalorder 1, %s18
      %p214 = scmp.lt.s32.totalorder %s18, 3
      %p215 = pnand %p213, %p214
      %p216 = pneg %p215
      // Predicated region
      $region33: #{tpu_custom_call.1} parent=5 // pred_check
        _
      $region34: #{tpu_custom_call.1} parent=5 // pred_check_branch
        %218 = sbr.rel (%p215) target = $region36
      $region35: #{tpu_custom_call.1} parent=5 // pred_region
        %s219 = ssub.s32 %s18, 1
        // Predicated region
        $region37: #{tpu_custom_call.1} parent=35 // pred_check
          %p220 = pneg %p39
        $region38: #{tpu_custom_call.1} parent=35 // pred_check_branch
          %222 = sbr.rel (%p220) target = $region40
        $region39: #{tpu_custom_call.1} parent=35 // pred_region
          %223 = dma.done [#allocation3], 1024
        $region40: #{tpu_custom_call.1} parent=35 // pred_fallthru
          _
        // Predicated region
        $region41: #{tpu_custom_call.1} parent=35 // pred_check
          %p224 = pneg %p60
        $region42: #{tpu_custom_call.1} parent=35 // pred_check_branch
          %226 = sbr.rel (%p224) target = $region44
        $region43: #{tpu_custom_call.1} parent=35 // pred_region
          %227 = dma.done [#allocation6], 1024
        $region44: #{tpu_custom_call.1} parent=35 // pred_fallthru
          _
        // Predicated region
        $region45: #{tpu_custom_call.1} parent=35 // pred_check
          %p228 = pneg %p81
        $region46: #{tpu_custom_call.1} parent=35 // pred_check_branch
          %230 = sbr.rel (%p228) target = $region48
        $region47: #{tpu_custom_call.1} parent=35 // pred_region
          %231 = dma.done [#allocation6], 1024
        $region48: #{tpu_custom_call.1} parent=35 // pred_fallthru
          _
        %s232 = sand.u32 %s94, 1
        %s233 = scalar_lea.sflag [#allocation9], %s232
        %s234 = sand.u32 %s94, 1
        %s235 = smul.addr %s234, 256
        %s236 = scalar_lea.vmem [#allocation8], %s235
        // Predicated region
        $region49: #{tpu_custom_call.1} parent=35 // pred_check
          %p237 = pneg %p107
        $region50: #{tpu_custom_call.1} parent=35 // pred_check_branch
          %239 = sbr.rel (%p237) target = $region52
        $region51: #{tpu_custom_call.1} parent=35 // pred_region
          %240 = dma.done %s233, 4096
        $region52: #{tpu_custom_call.1} parent=35 // pred_fallthru
          _
        %p241 = pneg %p39
        %p242 = pneg %p36
        %p243 = pneg %p60
        %p244 = pneg %p57
        %p245 = pneg %p81
        %p246 = pneg %p78
        %s247 = sand.u32 %s94, 1
        %s248 = scalar_lea.sflag [#allocation9], %s247
        %s249 = sand.u32 %s94, 1
        %s250 = smul.addr %s249, 256
        %s251 = scalar_lea.vmem [#allocation8], %s250
        %p252 = pneg %p107
        %p253 = pneg %p104
        %p254 = pneg %p133
        %p255 = pneg %p130
        %s256 = sand.u32 %s120, 1
        %s257 = scalar_lea.sflag [#allocation4], %s256
        %s258 = sand.u32 %s120, 1
        %s259 = smul.addr %s258, 256
        %s260 = scalar_lea.vmem [#allocation10], %s259
        %s261 = smul.u32 4, %s23
        %s262 = smul.u32 4, %s23
        %v263 = vld [vmem:[%s236] sm:$0xff]
        %v264 = vld [vmem:[%s236 + $0x8] sm:$0xff]
        %v265 = vld [vmem:[%s236 + $0x10] sm:$0xff]
        %v266 = vld [vmem:[%s236 + $0x18] sm:$0xff]
        %v267 = vld [vmem:[%s236 + $0x20] sm:$0xff]
        %v268 = vld [vmem:[%s236 + $0x28] sm:$0xff]
        %v269 = vld [vmem:[%s236 + $0x30] sm:$0xff]
        %v270 = vld [vmem:[%s236 + $0x38] sm:$0xff]
        %v271 = vld [vmem:[%s236 + $0x40] sm:$0xff]
        %v272 = vld [vmem:[%s236 + $0x48] sm:$0xff]
        %v273 = vld [vmem:[%s236 + $0x50] sm:$0xff]
        %v274 = vld [vmem:[%s236 + $0x58] sm:$0xff]
        %v275 = vld [vmem:[%s236 + $0x60] sm:$0xff]
        %v276 = vld [vmem:[%s236 + $0x68] sm:$0xff]
        %v277 = vld [vmem:[%s236 + $0x70] sm:$0xff]
        %v278 = vld [vmem:[%s236 + $0x78] sm:$0xff]
        %v279 = vld [vmem:[%s236 + $0x80] sm:$0xff]
        %v280 = vld [vmem:[%s236 + $0x88] sm:$0xff]
        %v281 = vld [vmem:[%s236 + $0x90] sm:$0xff]
        %v282 = vld [vmem:[%s236 + $0x98] sm:$0xff]
        %v283 = vld [vmem:[%s236 + $0xa0] sm:$0xff]
        %v284 = vld [vmem:[%s236 + $0xa8] sm:$0xff]
        %v285 = vld [vmem:[%s236 + $0xb0] sm:$0xff]
        %v286 = vld [vmem:[%s236 + $0xb8] sm:$0xff]
        %v287 = vld [vmem:[%s236 + $0xc0] sm:$0xff]
        %v288 = vld [vmem:[%s236 + $0xc8] sm:$0xff]
        %v289 = vld [vmem:[%s236 + $0xd0] sm:$0xff]
        %v290 = vld [vmem:[%s236 + $0xd8] sm:$0xff]
        %v291 = vld [vmem:[%s236 + $0xe0] sm:$0xff]
        %v292 = vld [vmem:[%s236 + $0xe8] sm:$0xff]
        %v293 = vld [vmem:[%s236 + $0xf0] sm:$0xff]
        %v294 = vld [vmem:[%s236 + $0xf8] sm:$0xff]
        %v295 = vld [vmem:[#allocation2] sm:$0xff]
        %v296 = vld [vmem:[#allocation2 + $0x8] sm:$0xff]
        %v297 = vld [vmem:[#allocation2 + $0x10] sm:$0xff]
        %v298 = vld [vmem:[#allocation2 + $0x18] sm:$0xff]
        %v299 = vld [vmem:[#allocation2 + $0x20] sm:$0xff]
        %v300 = vld [vmem:[#allocation2 + $0x28] sm:$0xff]
        %v301 = vld [vmem:[#allocation2 + $0x30] sm:$0xff]
        %v302 = vld [vmem:[#allocation2 + $0x38] sm:$0xff]
        %v303 = vld [vmem:[#allocation5] sm:$0xff]
        %v304 = vld [vmem:[#allocation5 + $0x8] sm:$0xff]
        %v305 = vld [vmem:[#allocation5 + $0x10] sm:$0xff]
        %v306 = vld [vmem:[#allocation5 + $0x18] sm:$0xff]
        %v307 = vld [vmem:[#allocation5 + $0x20] sm:$0xff]
        %v308 = vld [vmem:[#allocation5 + $0x28] sm:$0xff]
        %v309 = vld [vmem:[#allocation5 + $0x30] sm:$0xff]
        %v310 = vld [vmem:[#allocation5 + $0x38] sm:$0xff]
        %v311 = vld [vmem:[#allocation7] sm:$0xff]
        %v312 = vld [vmem:[#allocation7 + $0x8] sm:$0xff]
        %v313 = vld [vmem:[#allocation7 + $0x10] sm:$0xff]
        %v314 = vld [vmem:[#allocation7 + $0x18] sm:$0xff]
        %v315 = vld [vmem:[#allocation7 + $0x20] sm:$0xff]
        %v316 = vld [vmem:[#allocation7 + $0x28] sm:$0xff]
        %v317 = vld [vmem:[#allocation7 + $0x30] sm:$0xff]
        %v318 = vld [vmem:[#allocation7 + $0x38] sm:$0xff]
        %319 = vrot.lane.b32.xlu0 %v263, 127
        %v320 = vpop.permute.xlu0 %319
        %321 = vrot.lane.b32.xlu0 %v264, 127
        %v322 = vpop.permute.xlu0 %321
        %323 = vrot.lane.b32.xlu0 %v265, 127
        %v324 = vpop.permute.xlu0 %323
        %325 = vrot.lane.b32.xlu0 %v266, 127
        %v326 = vpop.permute.xlu0 %325
        %327 = vrot.lane.b32.xlu0 %v267, 127
        %v328 = vpop.permute.xlu0 %327
        %329 = vrot.lane.b32.xlu0 %v268, 127
        %v330 = vpop.permute.xlu0 %329
        %331 = vrot.lane.b32.xlu0 %v269, 127
        %v332 = vpop.permute.xlu0 %331
        %333 = vrot.lane.b32.xlu0 %v270, 127
        %v334 = vpop.permute.xlu0 %333
        %335 = vrot.lane.b32.xlu0 %v271, 127
        %v336 = vpop.permute.xlu0 %335
        %337 = vrot.lane.b32.xlu0 %v272, 127
        %v338 = vpop.permute.xlu0 %337
        %339 = vrot.lane.b32.xlu0 %v273, 127
        %v340 = vpop.permute.xlu0 %339
        %341 = vrot.lane.b32.xlu0 %v274, 127
        %v342 = vpop.permute.xlu0 %341
        %343 = vrot.lane.b32.xlu0 %v275, 127
        %v344 = vpop.permute.xlu0 %343
        %345 = vrot.lane.b32.xlu0 %v276, 127
        %v346 = vpop.permute.xlu0 %345
        %347 = vrot.lane.b32.xlu0 %v277, 127
        %v348 = vpop.permute.xlu0 %347
        %349 = vrot.lane.b32.xlu0 %v278, 127
        %v350 = vpop.permute.xlu0 %349
        %351 = vrot.lane.b32.xlu0 %v279, 127
        %v352 = vpop.permute.xlu0 %351
        %353 = vrot.lane.b32.xlu0 %v280, 127
        %v354 = vpop.permute.xlu0 %353
        %355 = vrot.lane.b32.xlu0 %v281, 127
        %v356 = vpop.permute.xlu0 %355
        %357 = vrot.lane.b32.xlu0 %v282, 127
        %v358 = vpop.permute.xlu0 %357
        %359 = vrot.lane.b32.xlu0 %v283, 127
        %v360 = vpop.permute.xlu0 %359
        %361 = vrot.lane.b32.xlu0 %v284, 127
        %v362 = vpop.permute.xlu0 %361
        %363 = vrot.lane.b32.xlu0 %v285, 127
        %v364 = vpop.permute.xlu0 %363
        %365 = vrot.lane.b32.xlu0 %v286, 127
        %v366 = vpop.permute.xlu0 %365
        %367 = vrot.lane.b32.xlu0 %v287, 127
        %v368 = vpop.permute.xlu0 %367
        %369 = vrot.lane.b32.xlu0 %v288, 127
        %v370 = vpop.permute.xlu0 %369
        %371 = vrot.lane.b32.xlu0 %v289, 127
        %v372 = vpop.permute.xlu0 %371
        %373 = vrot.lane.b32.xlu0 %v290, 127
        %v374 = vpop.permute.xlu0 %373
        %375 = vrot.lane.b32.xlu0 %v291, 127
        %v376 = vpop.permute.xlu0 %375
        %377 = vrot.lane.b32.xlu0 %v292, 127
        %v378 = vpop.permute.xlu0 %377
        %379 = vrot.lane.b32.xlu0 %v293, 127
        %v380 = vpop.permute.xlu0 %379
        %381 = vrot.lane.b32.xlu0 %v294, 127
        %v382 = vpop.permute.xlu0 %381
        %383 = vrot.lane.b32.xlu0 %v263, 1
        %v384 = vpop.permute.xlu0 %383
        %385 = vrot.lane.b32.xlu0 %v264, 1
        %v386 = vpop.permute.xlu0 %385
        %387 = vrot.lane.b32.xlu0 %v265, 1
        %v388 = vpop.permute.xlu0 %387
        %389 = vrot.lane.b32.xlu0 %v266, 1
        %v390 = vpop.permute.xlu0 %389
        %391 = vrot.lane.b32.xlu0 %v267, 1
        %v392 = vpop.permute.xlu0 %391
        %393 = vrot.lane.b32.xlu0 %v268, 1
        %v394 = vpop.permute.xlu0 %393
        %395 = vrot.lane.b32.xlu0 %v269, 1
        %v396 = vpop.permute.xlu0 %395
        %397 = vrot.lane.b32.xlu0 %v270, 1
        %v398 = vpop.permute.xlu0 %397
        %399 = vrot.lane.b32.xlu0 %v271, 1
        %v400 = vpop.permute.xlu0 %399
        %401 = vrot.lane.b32.xlu0 %v272, 1
        %v402 = vpop.permute.xlu0 %401
        %403 = vrot.lane.b32.xlu0 %v273, 1
        %v404 = vpop.permute.xlu0 %403
        %405 = vrot.lane.b32.xlu0 %v274, 1
        %v406 = vpop.permute.xlu0 %405
        %407 = vrot.lane.b32.xlu0 %v275, 1
        %v408 = vpop.permute.xlu0 %407
        %409 = vrot.lane.b32.xlu0 %v276, 1
        %v410 = vpop.permute.xlu0 %409
        %411 = vrot.lane.b32.xlu0 %v277, 1
        %v412 = vpop.permute.xlu0 %411
        %413 = vrot.lane.b32.xlu0 %v278, 1
        %v414 = vpop.permute.xlu0 %413
        %415 = vrot.lane.b32.xlu0 %v279, 1
        %v416 = vpop.permute.xlu0 %415
        %417 = vrot.lane.b32.xlu0 %v280, 1
        %v418 = vpop.permute.xlu0 %417
        %419 = vrot.lane.b32.xlu0 %v281, 1
        %v420 = vpop.permute.xlu0 %419
        %421 = vrot.lane.b32.xlu0 %v282, 1
        %v422 = vpop.permute.xlu0 %421
        %423 = vrot.lane.b32.xlu0 %v283, 1
        %v424 = vpop.permute.xlu0 %423
        %425 = vrot.lane.b32.xlu0 %v284, 1
        %v426 = vpop.permute.xlu0 %425
        %427 = vrot.lane.b32.xlu0 %v285, 1
        %v428 = vpop.permute.xlu0 %427
        %429 = vrot.lane.b32.xlu0 %v286, 1
        %v430 = vpop.permute.xlu0 %429
        %431 = vrot.lane.b32.xlu0 %v287, 1
        %v432 = vpop.permute.xlu0 %431
        %433 = vrot.lane.b32.xlu0 %v288, 1
        %v434 = vpop.permute.xlu0 %433
        %435 = vrot.lane.b32.xlu0 %v289, 1
        %v436 = vpop.permute.xlu0 %435
        %437 = vrot.lane.b32.xlu0 %v290, 1
        %v438 = vpop.permute.xlu0 %437
        %439 = vrot.lane.b32.xlu0 %v291, 1
        %v440 = vpop.permute.xlu0 %439
        %441 = vrot.lane.b32.xlu0 %v292, 1
        %v442 = vpop.permute.xlu0 %441
        %443 = vrot.lane.b32.xlu0 %v293, 1
        %v444 = vpop.permute.xlu0 %443
        %445 = vrot.lane.b32.xlu0 %v294, 1
        %v446 = vpop.permute.xlu0 %445
        %v447 = vmul.f32 %v263, %v295
        %v448 = vmul.f32 %v264, %v296
        %v449 = vmul.f32 %v265, %v297
        %v450 = vmul.f32 %v266, %v298
        %v451 = vmul.f32 %v267, %v299
        %v452 = vmul.f32 %v268, %v300
        %v453 = vmul.f32 %v269, %v301
        %v454 = vmul.f32 %v270, %v302
        %v455 = vmul.f32 %v271, %v295
        %v456 = vmul.f32 %v272, %v296
        %v457 = vmul.f32 %v273, %v297
        %v458 = vmul.f32 %v274, %v298
        %v459 = vmul.f32 %v275, %v299
        %v460 = vmul.f32 %v276, %v300
        %v461 = vmul.f32 %v277, %v301
        %v462 = vmul.f32 %v278, %v302
        %v463 = vmul.f32 %v279, %v295
        %v464 = vmul.f32 %v280, %v296
        %v465 = vmul.f32 %v281, %v297
        %v466 = vmul.f32 %v282, %v298
        %v467 = vmul.f32 %v283, %v299
        %v468 = vmul.f32 %v284, %v300
        %v469 = vmul.f32 %v285, %v301
        %v470 = vmul.f32 %v286, %v302
        %v471 = vmul.f32 %v287, %v295
        %v472 = vmul.f32 %v288, %v296
        %v473 = vmul.f32 %v289, %v297
        %v474 = vmul.f32 %v290, %v298
        %v475 = vmul.f32 %v291, %v299
        %v476 = vmul.f32 %v292, %v300
        %v477 = vmul.f32 %v293, %v301
        %v478 = vmul.f32 %v294, %v302
        %v479 = vmul.f32 %v320, %v303
        %v480 = vmul.f32 %v322, %v304
        %v481 = vmul.f32 %v324, %v305
        %v482 = vmul.f32 %v326, %v306
        %v483 = vmul.f32 %v328, %v307
        %v484 = vmul.f32 %v330, %v308
        %v485 = vmul.f32 %v332, %v309
        %v486 = vmul.f32 %v334, %v310
        %v487 = vmul.f32 %v336, %v303
        %v488 = vmul.f32 %v338, %v304
        %v489 = vmul.f32 %v340, %v305
        %v490 = vmul.f32 %v342, %v306
        %v491 = vmul.f32 %v344, %v307
        %v492 = vmul.f32 %v346, %v308
        %v493 = vmul.f32 %v348, %v309
        %v494 = vmul.f32 %v350, %v310
        %v495 = vmul.f32 %v352, %v303
        %v496 = vmul.f32 %v354, %v304
        %v497 = vmul.f32 %v356, %v305
        %v498 = vmul.f32 %v358, %v306
        %v499 = vmul.f32 %v360, %v307
        %v500 = vmul.f32 %v362, %v308
        %v501 = vmul.f32 %v364, %v309
        %v502 = vmul.f32 %v366, %v310
        %v503 = vmul.f32 %v368, %v303
        %v504 = vmul.f32 %v370, %v304
        %v505 = vmul.f32 %v372, %v305
        %v506 = vmul.f32 %v374, %v306
        %v507 = vmul.f32 %v376, %v307
        %v508 = vmul.f32 %v378, %v308
        %v509 = vmul.f32 %v380, %v309
        %v510 = vmul.f32 %v382, %v310
        %v511 = vadd.f32 %v447, %v479
        %v512 = vadd.f32 %v448, %v480
        %v513 = vadd.f32 %v449, %v481
        %v514 = vadd.f32 %v450, %v482
        %v515 = vadd.f32 %v451, %v483
        %v516 = vadd.f32 %v452, %v484
        %v517 = vadd.f32 %v453, %v485
        %v518 = vadd.f32 %v454, %v486
        %v519 = vadd.f32 %v455, %v487
        %v520 = vadd.f32 %v456, %v488
        %v521 = vadd.f32 %v457, %v489
        %v522 = vadd.f32 %v458, %v490
        %v523 = vadd.f32 %v459, %v491
        %v524 = vadd.f32 %v460, %v492
        %v525 = vadd.f32 %v461, %v493
        %v526 = vadd.f32 %v462, %v494
        %v527 = vadd.f32 %v463, %v495
        %v528 = vadd.f32 %v464, %v496
        %v529 = vadd.f32 %v465, %v497
        %v530 = vadd.f32 %v466, %v498
        %v531 = vadd.f32 %v467, %v499
        %v532 = vadd.f32 %v468, %v500
        %v533 = vadd.f32 %v469, %v501
        %v534 = vadd.f32 %v470, %v502
        %v535 = vadd.f32 %v471, %v503
        %v536 = vadd.f32 %v472, %v504
        %v537 = vadd.f32 %v473, %v505
        %v538 = vadd.f32 %v474, %v506
        %v539 = vadd.f32 %v475, %v507
        %v540 = vadd.f32 %v476, %v508
        %v541 = vadd.f32 %v477, %v509
        %v542 = vadd.f32 %v478, %v510
        %v543 = vmul.f32 %v384, %v311
        %v544 = vmul.f32 %v386, %v312
        %v545 = vmul.f32 %v388, %v313
        %v546 = vmul.f32 %v390, %v314
        %v547 = vmul.f32 %v392, %v315
        %v548 = vmul.f32 %v394, %v316
        %v549 = vmul.f32 %v396, %v317
        %v550 = vmul.f32 %v398, %v318
        %v551 = vmul.f32 %v400, %v311
        %v552 = vmul.f32 %v402, %v312
        %v553 = vmul.f32 %v404, %v313
        %v554 = vmul.f32 %v406, %v314
        %v555 = vmul.f32 %v408, %v315
        %v556 = vmul.f32 %v410, %v316
        %v557 = vmul.f32 %v412, %v317
        %v558 = vmul.f32 %v414, %v318
        %v559 = vmul.f32 %v416, %v311
        %v560 = vmul.f32 %v418, %v312
        %v561 = vmul.f32 %v420, %v313
        %v562 = vmul.f32 %v422, %v314
        %v563 = vmul.f32 %v424, %v315
        %v564 = vmul.f32 %v426, %v316
        %v565 = vmul.f32 %v428, %v317
        %v566 = vmul.f32 %v430, %v318
        %v567 = vmul.f32 %v432, %v311
        %v568 = vmul.f32 %v434, %v312
        %v569 = vmul.f32 %v436, %v313
        %v570 = vmul.f32 %v438, %v314
        %v571 = vmul.f32 %v440, %v315
        %v572 = vmul.f32 %v442, %v316
        %v573 = vmul.f32 %v444, %v317
        %v574 = vmul.f32 %v446, %v318
        %v575 = vadd.f32 %v511, %v543
        %v576 = vadd.f32 %v512, %v544
        %v577 = vadd.f32 %v513, %v545
        %v578 = vadd.f32 %v514, %v546
        %v579 = vadd.f32 %v515, %v547
        %v580 = vadd.f32 %v516, %v548
        %v581 = vadd.f32 %v517, %v549
        %v582 = vadd.f32 %v518, %v550
        %v583 = vadd.f32 %v519, %v551
        %v584 = vadd.f32 %v520, %v552
        %v585 = vadd.f32 %v521, %v553
        %v586 = vadd.f32 %v522, %v554
        %v587 = vadd.f32 %v523, %v555
        %v588 = vadd.f32 %v524, %v556
        %v589 = vadd.f32 %v525, %v557
        %v590 = vadd.f32 %v526, %v558
        %v591 = vadd.f32 %v527, %v559
        %v592 = vadd.f32 %v528, %v560
        %v593 = vadd.f32 %v529, %v561
        %v594 = vadd.f32 %v530, %v562
        %v595 = vadd.f32 %v531, %v563
        %v596 = vadd.f32 %v532, %v564
        %v597 = vadd.f32 %v533, %v565
        %v598 = vadd.f32 %v534, %v566
        %v599 = vadd.f32 %v535, %v567
        %v600 = vadd.f32 %v536, %v568
        %v601 = vadd.f32 %v537, %v569
        %v602 = vadd.f32 %v538, %v570
        %v603 = vadd.f32 %v539, %v571
        %v604 = vadd.f32 %v540, %v572
        %v605 = vadd.f32 %v541, %v573
        %v606 = vadd.f32 %v542, %v574
        %607 = vst [vmem:[%s260] sm:$0xff] %v575
        %608 = vst [vmem:[%s260 + $0x8] sm:$0xff] %v576
        %609 = vst [vmem:[%s260 + $0x10] sm:$0xff] %v577
        %610 = vst [vmem:[%s260 + $0x18] sm:$0xff] %v578
        %611 = vst [vmem:[%s260 + $0x20] sm:$0xff] %v579
        %612 = vst [vmem:[%s260 + $0x28] sm:$0xff] %v580
        %613 = vst [vmem:[%s260 + $0x30] sm:$0xff] %v581
        %614 = vst [vmem:[%s260 + $0x38] sm:$0xff] %v582
        %615 = vst [vmem:[%s260 + $0x40] sm:$0xff] %v583
        %616 = vst [vmem:[%s260 + $0x48] sm:$0xff] %v584
        %617 = vst [vmem:[%s260 + $0x50] sm:$0xff] %v585
        %618 = vst [vmem:[%s260 + $0x58] sm:$0xff] %v586
        %619 = vst [vmem:[%s260 + $0x60] sm:$0xff] %v587
        %620 = vst [vmem:[%s260 + $0x68] sm:$0xff] %v588
        %621 = vst [vmem:[%s260 + $0x70] sm:$0xff] %v589
        %622 = vst [vmem:[%s260 + $0x78] sm:$0xff] %v590
        %623 = vst [vmem:[%s260 + $0x80] sm:$0xff] %v591
        %624 = vst [vmem:[%s260 + $0x88] sm:$0xff] %v592
        %625 = vst [vmem:[%s260 + $0x90] sm:$0xff] %v593
        %626 = vst [vmem:[%s260 + $0x98] sm:$0xff] %v594
        %627 = vst [vmem:[%s260 + $0xa0] sm:$0xff] %v595
        %628 = vst [vmem:[%s260 + $0xa8] sm:$0xff] %v596
        %629 = vst [vmem:[%s260 + $0xb0] sm:$0xff] %v597
        %630 = vst [vmem:[%s260 + $0xb8] sm:$0xff] %v598
        %631 = vst [vmem:[%s260 + $0xc0] sm:$0xff] %v599
        %632 = vst [vmem:[%s260 + $0xc8] sm:$0xff] %v600
        %633 = vst [vmem:[%s260 + $0xd0] sm:$0xff] %v601
        %634 = vst [vmem:[%s260 + $0xd8] sm:$0xff] %v602
        %635 = vst [vmem:[%s260 + $0xe0] sm:$0xff] %v603
        %636 = vst [vmem:[%s260 + $0xe8] sm:$0xff] %v604
        %637 = vst [vmem:[%s260 + $0xf0] sm:$0xff] %v605
        %638 = vst [vmem:[%s260 + $0xf8] sm:$0xff] %v606
        %s639 = sand.u32 %s120, 1
        %s640 = scalar_lea.sflag [#allocation4], %s639
        %s641 = sand.u32 %s120, 1
        %s642 = smul.addr %s641, 256
        %s643 = scalar_lea.vmem [#allocation10], %s642
        // Predicated region
        $region53: #{tpu_custom_call.1} parent=35 // pred_check
          %p644 = pneg %p130
        $region54: #{tpu_custom_call.1} parent=35 // pred_check_branch
          %646 = sbr.rel (%p644) target = $region56
        $region55: #{tpu_custom_call.1} parent=35 // pred_region
          %s647 = smul.u32 4, %s23
          %s649 = ssub.s32 4096, 4096
          %650 = vsyncadd %s640, %s649
          %s651 = smul.addr %s647, 8
          %s652 = smul.addr %s651, 128
          %s653 = scalar_lea.hbm %s4, %s652
          %s654 = sshll.u32 %s643, 4
          %s655 = int_to_ptr.vmem [resolvable:$true] %s654
          %660 = dma.vmem_to_hbm [thread:$0]  %s655, 4096, %s653, %s640, 128, 128, 8
        $region56: #{tpu_custom_call.1} parent=35 // pred_fallthru
          _
      $region36: #{tpu_custom_call.1} parent=5 // pred_fallthru
        _
      %p661 = scmp.le.s32.totalorder 2, %s18
      // Predicated region
      $region57: #{tpu_custom_call.1} parent=5 // pred_check
        %p662 = pneg %p661
      $region58: #{tpu_custom_call.1} parent=5 // pred_check_branch
        %664 = sbr.rel (%p662) target = $region60
      $region59: #{tpu_custom_call.1} parent=5 // pred_region
        %s665 = ssub.s32 %s18, 2
        // Predicated region
        $region61: #{tpu_custom_call.1} parent=59 // pred_check
          %p666 = pneg %p136
        $region62: #{tpu_custom_call.1} parent=59 // pred_check_branch
          %668 = sbr.rel (%p666) target = $region64
        $region63: #{tpu_custom_call.1} parent=59 // pred_region
          %s669 = sand.u32 %s121, 1
          %s670 = scalar_lea.sflag [#allocation4], %s669
          %s671 = sand.u32 %s121, 1
          %s672 = smul.addr %s671, 256
          %s673 = scalar_lea.vmem [#allocation10], %s672
          %674 = dma.done %s670, 4096
        $region64: #{tpu_custom_call.1} parent=59 // pred_fallthru
          _
      $region60: #{tpu_custom_call.1} parent=5 // pred_fallthru
        _
    $region6: #{tpu_custom_call.1} parent=1 // loop_footer
      %s22 = sadd.s32 1, %s18
    $region7: #{tpu_custom_call.1} parent=1 // loop_footer_branch
      %17 = sbr.rel target = $region3
    $region8: #{tpu_custom_call.1} parent=1 // loop_exit
      _
    %675 = vsyncpa [#allocation3], 1
    %s676 = scalar_lea.sflag [#allocation3], 1
    %677 = vsyncpa %s676, 1
    %678 = vsyncpa [#allocation6], 1
    %679 = vsyncpa [#allocation9], 1
    %s680 = scalar_lea.sflag [#allocation9], 1
    %681 = vsyncpa %s680, 1
    %682 = vsyncpa [#allocation4], 1
    %s683 = scalar_lea.sflag [#allocation4], 1
    %684 = vsyncpa %s683, 1

</llo_original>
